<compile_context>
chip_gen: v6e
topology: v6e:2x2x1
jax: 0.10.0
libtpu: 0.0.40
codegen_flags: <defaults>
</compile_context>

<pallas_src>
import math

import jax
import jax.numpy as jnp
from jax.experimental import pallas as pl
from jax.experimental.pallas import tpu as pltpu


def _copy_kernel(emb_ref, out_ref):
    # Pure data movement: BlockSpec-driven DMAs do the HBM traffic; this just
    # forwards the current tile between the pipelined input and output VMEM
    # buffers.
    out_ref[...] = emb_ref[...]


def _round_up(x: int, m: int) -> int:
    return ((x + m - 1) // m) * m


def _round_down(x: int, m: int) -> int:
    return (x // m) * m


def _vmem_capacity_bytes() -> int:
    """Physical VMEM per TensorCore; conservative 64 MiB fallback (v7x)."""
    try:
        info = pltpu.get_tpu_info()
        cap = getattr(info, "vmem_capacity_bytes", None)
        if cap:
            return int(cap)
    except Exception:
        pass
    return 64 * 1024 * 1024


def relative_position_encoding(embeddings: jax.Array, seq_len: int, *,
                               pipeline_budget_bytes: int | None = None
                               ) -> jax.Array:
    """Returns embeddings[:seq_len, :seq_len, :] via a Pallas TPU kernel.

    `seq_len` must be a static Python int (JAX shapes are static).
    """
    max_len, max_len2, num_heads = embeddings.shape
    assert max_len == max_len2, "table must be square in its first two dims"
    assert isinstance(seq_len, int), "seq_len must be a static Python int"
    # TODO(synk): traced (dynamic) seq_len has no Pallas equivalent since
    # output shapes are static; only static Python ints are supported.
    assert 0 < seq_len <= max_len

    # Fast path: the slice is the identity -> no kernel launch, no HBM pass.
    if seq_len == max_len:
        return embeddings

    dtype = embeddings.dtype
    itemsize = jnp.dtype(dtype).itemsize

    # Generation-aware budget for the 4-buffer pipeline (in+out, dbl-buffered).
    vmem_cap = _vmem_capacity_bytes()
    if pipeline_budget_bytes is None:
        pipeline_budget_bytes = min(40 * 1024 * 1024, (vmem_cap * 7) // 10)
    per_buffer_budget = max(pipeline_budget_bytes // 4, 4096)

    # Lane-dense 2D view: row i of emb2d is embeddings[i].reshape(-1), so its
    # first seq_len*num_heads entries are embeddings[i, :seq_len, :].
    rows = max_len
    total_cols = max_len * num_heads
    emb2d = embeddings.reshape(rows, total_cols)

    # Column window: smallest seq_pad >= seq_len with seq_pad*num_heads a
    # multiple of 128 (lane-aligned, unmasked stores), capped at the full
    # column extent (a full-dim block is always legal).
    step = 128 // math.gcd(num_heads, 128)
    col_elems = min(_round_up(seq_len, step) * num_heads, total_cols)
    seq_pad = col_elems // num_heads          # columns carried by the kernel

    # Dtype-aware sublane granularity (perf); 8 is the legality floor.
    sublane_mult = {4: 8, 2: 16, 1: 32}.get(itemsize, 8)

    if rows < 8:
        # Tiny table: full-dim blocks are legal even below 8 sublanes; no pad.
        out_rows = rows
        tile_r = rows
        tile_c = col_elems
    else:
        out_rows = max(seq_len, 8)            # <= rows (rows >= 8, seq_len <= rows)
        tile_align = sublane_mult if out_rows >= sublane_mult else 8
        row_bytes = col_elems * itemsize

        if tile_align * row_bytes > per_buffer_budget and col_elems > 128:
            # Very wide rows: column-tile in 128-lane multiples to bound VMEM.
            tile_r = tile_align
            tile_c = _round_down(per_buffer_budget // (tile_r * itemsize), 128)
            tile_c = max(128, min(tile_c, _round_down(col_elems, 128)))
        else:
            # Full-width row tiles, as tall as the per-buffer budget allows.
            tile_c = col_elems
            tile_r = _round_down(per_buffer_budget // max(row_bytes, 1),
                                 tile_align)
            tile_r = max(8, min(tile_r, _round_down(out_rows, 8)))

        # Ensure >= 2 grid steps (when possible) so v7x's two TensorCores both
        # participate; one extra ~0.35us step is noise on single-TC chips.
        row_steps = pl.cdiv(out_rows, tile_r)
        col_steps = pl.cdiv(col_elems, tile_c)
        if row_steps * col_steps < 2 and out_rows >= 16:
            tile_r = max(8, _round_down(out_rows // 2, 8))

    row_steps = pl.cdiv(out_rows, tile_r)
    col_steps = pl.cdiv(col_elems, tile_c)
    grid = (row_steps, col_steps)

    tile_bytes = tile_r * tile_c * itemsize
    vmem_limit = int(min((vmem_cap * 9) // 10,
                         max(4 * tile_bytes + (8 << 20), 32 << 20)))

    out2d = pl.pallas_call(
        _copy_kernel,
        out_shape=jax.ShapeDtypeStruct((out_rows, col_elems), dtype),
        grid=grid,
        in_specs=[pl.BlockSpec((tile_r, tile_c), lambda i, j: (i, j))],
        out_specs=pl.BlockSpec((tile_r, tile_c), lambda i, j: (i, j)),
        compiler_params=pltpu.CompilerParams(
            dimension_semantics=("parallel", "parallel"),
            vmem_limit_bytes=vmem_limit),
    )(emb2d)

    out3d = out2d.reshape(out_rows, seq_pad, num_heads)
    if out_rows != seq_len or seq_pad != seq_len:
        out3d = out3d[:seq_len, :seq_len, :]
    return out3d


class RelativePositionEncoding:
    """JAX/Pallas port of the PyTorch module (deterministic synthetic init)."""

    def __init__(self, num_heads: int, max_len: int, key=None):
        self.num_heads = num_heads
        self.max_len = max_len
        if key is None:
            key = jax.random.PRNGKey(0)
        # torch.randn(max_len, max_len, num_heads) analogue.
        self.relative_position_embeddings = jax.random.normal(
            key, (max_len, max_len, num_heads), dtype=jnp.float32)

    def __call__(self, seq_len: int) -> jax.Array:
        return relative_position_encoding(self.relative_position_embeddings,
                                          seq_len)


if __name__ == "__main__":
    # Primary case (matches the module spec at small shapes).
    num_heads = 4
    max_len = 16
    seq_len = 8

    module = RelativePositionEncoding(num_heads, max_len,
                                      key=jax.random.PRNGKey(0))
    out = jax.block_until_ready(module(seq_len))

    ref = module.relative_position_embeddings[:seq_len, :seq_len, :]
    assert out.shape == (seq_len, seq_len, num_heads), out.shape
    assert out.dtype == jnp.float32, out.dtype
    assert jnp.array_equal(out, ref), "Pallas slice mismatch vs reference"

    # Unaligned seq_len (not a multiple of 8) — exercises the crop path.
    out5 = jax.block_until_ready(module(5))
    ref5 = module.relative_position_embeddings[:5, :5, :]
    assert out5.shape == (5, 5, num_heads)
    assert jnp.array_equal(out5, ref5), "unaligned seq_len mismatch"

    # Fast path: seq_len == max_len is the identity.
    out_full = jax.block_until_ready(module(max_len))
    assert jnp.array_equal(out_full, module.relative_position_embeddings)

    # Row-tiled multi-step grid with a partial boundary row block
    # (tiny budget forces tile_r=8, grid=(3,1) on a 32x32x8 table).
    key2 = jax.random.PRNGKey(1)
    emb_big = jax.random.normal(key2, (32, 32, 8), dtype=jnp.float32)
    out_big = jax.block_until_ready(
        relative_position_encoding(emb_big, 20, pipeline_budget_bytes=32 * 1024))
    ref_big = emb_big[:20, :20, :]
    assert out_big.shape == (20, 20, 8)
    assert jnp.array_equal(out_big, ref_big), "row-tiled path mismatch"

    # Column-tiled path (budget too small even for an 8-row full-width block
    # -> tile (8, 128), grid=(3,2)).
    out_col = jax.block_until_ready(
        relative_position_encoding(emb_big, 20, pipeline_budget_bytes=16 * 1024))
    assert out_col.shape == (20, 20, 8)
    assert jnp.array_equal(out_col, ref_big), "column-tiled path mismatch"

    print("KERNEL_OK")
</pallas_src>

<mosaic_0001>
module attributes {stable_mosaic.version = 11 : i64} {
  func.func @_copy_kernel(%arg0: i32, %arg1: i32, %arg2: memref<8x64xf32, #tpu.memory_space<vmem>>, %arg3: memref<8x64xf32, #tpu.memory_space<vmem>>) attributes {dimension_semantics = [#tpu.dimension_semantics<parallel>, #tpu.dimension_semantics<parallel>], iteration_bounds = array<i64: 1, 1>, scalar_prefetch = 0 : i64, scratch_operands = 0 : i64, tpu.core_type = #tpu.core_type<tc>, window_params = [{transform_indices = @transform_0, window_bounds = array<i64: 8, 64>}, {transform_indices = @transform_1, window_bounds = array<i64: 8, 64>}]} {
    %c0 = arith.constant 0 : index
    %c0_0 = arith.constant 0 : index
    %0 = vector.load %arg2[%c0, %c0_0] : memref<8x64xf32, #tpu.memory_space<vmem>>, vector<8x64xf32>
    %c0_1 = arith.constant 0 : index
    %c0_2 = arith.constant 0 : index
    %1 = vector.load %arg3[%c0_1, %c0_2] : memref<8x64xf32, #tpu.memory_space<vmem>>, vector<8x64xf32>
    tpu.vector_store %arg3[%c0_1, %c0_2], %0 {strides = array<i32>} : memref<8x64xf32, #tpu.memory_space<vmem>>, vector<8x64xf32>,
    return
  }
  func.func @transform_0(%arg0: i32, %arg1: i32) -> (i32, i32) {
    %c0_i32 = arith.constant 0 : i32
    return %arg0, %arg1 : i32, i32
  }
  func.func @transform_1(%arg0: i32, %arg1: i32) -> (i32, i32) {
    %c0_i32 = arith.constant 0 : i32
    return %arg0, %arg1 : i32, i32
  }
}

</mosaic_0001>

<llo_original>
// kernel: tpu_custom_call.1
$region0: #{tpu_custom_call.1}
  #allocation0 [shape = 'u32[]', space=smem, size = 0x4, offset = 0x4, fixed_abs, tag = 'smem constant byte address 0x4 - core index']
  #allocation1 [shape = 'u32[144,128]{1,0:T(1,128)}', space=vmem, size = 0x12000, scoped, tag = 'internal scratch']
  %s0 = inlined_call_operand.hbm [shape: f32[16,64], index: 0, kind: input, shape index: {}]
  %s1 = inlined_call_operand.hbm [shape: f32[8,64], index: 1, kind: output, shape index: {}]
  %s2 = sld [smem:[#allocation0]]
  $region18: #{tpu_custom_call.1} parent=0
    _
  %s4 = ssub.s32 1, %s2
  %s5 = scalar_select 0, %s4, %s2
  $region1: #{tpu_custom_call.1} parent=0
    #allocation2 [shape = 'u8[4096]{0}', space=vmem, size = 0x1000, scoped, tag = 'input window, operand 0, single buffered']
    #allocation3 [shape = 's32[1]{0}', space=sflag, size = 0x4, scoped, tag = 'scoped memory for tpu_custom_call.1']
    #allocation4 [shape = 's32[1]{0}', space=sflag, size = 0x4, scoped, tag = 'scoped memory for tpu_custom_call.1']
    #allocation5 [shape = 'u8[4096]{0}', space=vmem, size = 0x1000, scoped, tag = 'output window, operand 0, single buffered']
    %6 = vsyncpa [#allocation3], 0
    %7 = vsyncpa [#allocation4], 0
    // Predicated region
    $region2: #{tpu_custom_call.1} parent=1 // pred_check
      _
    $region3: #{tpu_custom_call.1} parent=1 // pred_check_branch
      %9 = sbr.rel (0) target = $region5
    $region4: #{tpu_custom_call.1} parent=1 // pred_region
      %s11 = ssub.s32 128, 128
      %12 = vsyncadd [#allocation3], %s11
      %s14 = sshll.u32 [#allocation2], 4
      %s15 = int_to_ptr.vmem [resolvable:$true] %s14
      %17 = dma.hbm_to_vmem [thread:$0]  %s0, 128, %s15, [#allocation3]
    $region5: #{tpu_custom_call.1} parent=1 // pred_fallthru
      _
    // Predicated region
    $region6: #{tpu_custom_call.1} parent=1 // pred_check
      _
    $region7: #{tpu_custom_call.1} parent=1 // pred_check_branch
      %19 = sbr.rel (0) target = $region9
    $region8: #{tpu_custom_call.1} parent=1 // pred_region
      %20 = dma.done [#allocation3], 128
    $region9: #{tpu_custom_call.1} parent=1 // pred_fallthru
      _
    %v21 = vld [vmem:[#allocation2] sm:$0xff]
    %vm22 = vcmask 523264
    %23 = vst.msk [vmem:[#allocation5] sm:$0xff] %vm22, %v21
    // Predicated region
    $region10: #{tpu_custom_call.1} parent=1 // pred_check
      _
    $region11: #{tpu_custom_call.1} parent=1 // pred_check_branch
      %25 = sbr.rel (0) target = $region13
    $region12: #{tpu_custom_call.1} parent=1 // pred_region
      %s27 = ssub.s32 128, 128
      %28 = vsyncadd [#allocation4], %s27
      %s30 = sshll.u32 [#allocation5], 4
      %s31 = int_to_ptr.vmem [resolvable:$true] %s30
      %33 = dma.vmem_to_hbm [thread:$0]  %s31, 128, %s1, [#allocation4]
    $region13: #{tpu_custom_call.1} parent=1 // pred_fallthru
      _
    // Predicated region
    $region14: #{tpu_custom_call.1} parent=1 // pred_check
      _
    $region15: #{tpu_custom_call.1} parent=1 // pred_check_branch
      %35 = sbr.rel (0) target = $region17
    $region16: #{tpu_custom_call.1} parent=1 // pred_region
      %36 = dma.done [#allocation4], 128
    $region17: #{tpu_custom_call.1} parent=1 // pred_fallthru
      _
    %37 = vsyncpa [#allocation3], 1
    %38 = vsyncpa [#allocation4], 1

</llo_original>
